<compile_context>
chip_gen: v6e
topology: v6e:2x2x1
jax: 0.10.0
libtpu: 0.0.40
codegen_flags: <defaults>
</compile_context>

<pallas_src>
import functools

import jax
import jax.numpy as jnp
from jax.experimental import pallas as pl
from jax.experimental.pallas import tpu as pltpu

_LANE = 128
_SUBLANE = 8
_TILE_R = 512  # 512 x 128 x 4B = 256 KiB per f32 tile


def _stats_kernel(params_ref, x_ref, s1_ref, s2_ref, *, last_tile_valid, has_pad):
    """Phase A: per-lane partial sums of y and y*y, y = relu(x*w1 + b1)."""
    w1 = params_ref[0]
    b1 = params_ref[1]
    i = pl.program_id(0)
    last = pl.num_programs(0) - 1

    x = x_ref[...].astype(jnp.float32)
    y = jnp.maximum(x * w1 + b1, 0.0)

    @pl.when(i == 0)
    def _():
        s1_ref[...] = jnp.zeros_like(s1_ref)
        s2_ref[...] = jnp.zeros_like(s2_ref)

    def _accumulate(yv):
        s1_ref[...] += jnp.sum(yv, axis=0, keepdims=True)
        s2_ref[...] += jnp.sum(yv * yv, axis=0, keepdims=True)

    if has_pad:
        # Padding only ever lives in the final tile -> mask only there.
        @pl.when(i != last)
        def _():
            _accumulate(y)

        @pl.when(i == last)
        def _():
            r = jax.lax.broadcasted_iota(jnp.int32, y.shape, 0)
            c = jax.lax.broadcasted_iota(jnp.int32, y.shape, 1)
            mask = (r * _LANE + c) < last_tile_valid  # static RHS
            _accumulate(jnp.where(mask, y, 0.0))
    else:
        _accumulate(y)


def _apply_kernel(params_ref, x_ref, o_ref):
    """Phase B: recompute y and apply fused BN-affine + conv2: out = y*s + t."""
    w1 = params_ref[0]
    b1 = params_ref[1]
    s = params_ref[2]
    t = params_ref[3]
    x = x_ref[...].astype(jnp.float32)
    y = jnp.maximum(x * w1 + b1, 0.0)
    o_ref[...] = (y * s + t).astype(o_ref.dtype)


@jax.jit
def model_forward(x_nchw, w1, b1, gamma, beta, w2, b2):
    """x_nchw: (N, 1, H, W) float32.  Scalar conv1/conv2/BN parameters."""
    N, C, H, W = x_nchw.shape
    assert C == 1, "kernel specialised for C == 1 (BN stats become global)"
    eps = 1e-5
    total = N * C * H * W

    # ---- lane-dense slab layout (zero-copy reshape when already aligned) ----
    rows_needed = (total + _LANE - 1) // _LANE
    rows_pad = ((rows_needed + _SUBLANE - 1) // _SUBLANE) * _SUBLANE
    if rows_pad > _TILE_R:
        tile_r = _TILE_R
        rows_pad = ((rows_pad + _TILE_R - 1) // _TILE_R) * _TILE_R
    else:
        tile_r = rows_pad
    n_tiles = rows_pad // tile_r
    padded_total = rows_pad * _LANE
    has_pad = padded_total != total
    last_tile_valid = total - (n_tiles - 1) * tile_r * _LANE  # static python int

    if has_pad:
        x_flat = x_nchw.reshape(-1)
        x_slab = jnp.pad(x_flat, (0, padded_total - total)).reshape(rows_pad, _LANE)
    else:
        x_slab = x_nchw.reshape(rows_pad, _LANE)  # zero-copy reshape

    w1f = jnp.asarray(w1, jnp.float32)
    b1f = jnp.asarray(b1, jnp.float32)

    # ---- phase A: streaming statistics ----
    stats_params = jnp.stack([w1f, b1f])
    s1_lanes, s2_lanes = pl.pallas_call(
        functools.partial(
            _stats_kernel, last_tile_valid=last_tile_valid, has_pad=has_pad
        ),
        out_shape=(
            jax.ShapeDtypeStruct((1, _LANE), jnp.float32),
            jax.ShapeDtypeStruct((1, _LANE), jnp.float32),
        ),
        grid=(n_tiles,),
        in_specs=[
            pl.BlockSpec(memory_space=pltpu.SMEM),            # w1, b1 scalars
            pl.BlockSpec((tile_r, _LANE), lambda i: (i, 0)),  # x tile
        ],
        out_specs=(
            pl.BlockSpec((1, _LANE), lambda i: (0, 0)),       # resident s1 acc
            pl.BlockSpec((1, _LANE), lambda i: (0, 0)),       # resident s2 acc
        ),
        compiler_params=pltpu.CompilerParams(
            dimension_semantics=("arbitrary",)
        ),
    )(stats_params, x_slab)

    # ---- scalar finalize (tiny, done in the wrapper) ----
    n = jnp.float32(total)
    s1 = jnp.sum(s1_lanes)
    s2 = jnp.sum(s2_lanes)
    mean = s1 / n
    var = jnp.maximum(s2 / n - mean * mean, 0.0)  # guard cancellation
    inv_std = jax.lax.rsqrt(var + jnp.float32(eps))

    g2 = jnp.asarray(gamma, jnp.float32) * jnp.asarray(w2, jnp.float32)
    c2 = (
        jnp.asarray(beta, jnp.float32) * jnp.asarray(w2, jnp.float32)
        + jnp.asarray(b2, jnp.float32)
    )
    scale = inv_std * g2
    shift = c2 - mean * scale

    # ---- phase B: streaming apply ----
    apply_params = jnp.stack([w1f, b1f, scale, shift])
    out_slab = pl.pallas_call(
        _apply_kernel,
        out_shape=jax.ShapeDtypeStruct((rows_pad, _LANE), x_nchw.dtype),
        grid=(n_tiles,),
        in_specs=[
            pl.BlockSpec(memory_space=pltpu.SMEM),
            pl.BlockSpec((tile_r, _LANE), lambda i: (i, 0)),
        ],
        out_specs=pl.BlockSpec((tile_r, _LANE), lambda i: (i, 0)),
        compiler_params=pltpu.CompilerParams(
            dimension_semantics=("parallel",)
        ),
    )(apply_params, x_slab)

    if has_pad:
        return out_slab.reshape(-1)[:total].reshape(N, C, H, W)
    return out_slab.reshape(N, C, H, W)


def reference_forward(x_nchw, w1, b1, gamma, beta, w2, b2, eps=1e-5):
    y = x_nchw * w1 + b1
    y = jnp.maximum(y, 0.0)
    mean = jnp.mean(y, axis=(0, 2, 3), keepdims=True)
    var = jnp.mean((y - mean) ** 2, axis=(0, 2, 3), keepdims=True)
    y = (y - mean) * jax.lax.rsqrt(var + eps)
    y = y * gamma + beta
    return y * w2 + b2


if __name__ == "__main__":
    key = jax.random.PRNGKey(0)
    k_x, k_w1, k_b1, k_w2, k_b2 = jax.random.split(key, 5)

    # Deterministic scalar parameters (PyTorch Conv2d(1,1,1) default init is
    # uniform(-1, 1) since fan_in = 1); BatchNorm2d defaults gamma=1, beta=0.
    w1 = jax.random.uniform(k_w1, (), minval=-1.0, maxval=1.0)
    b1 = jax.random.uniform(k_b1, (), minval=-1.0, maxval=1.0)
    w2 = jax.random.uniform(k_w2, (), minval=-1.0, maxval=1.0)
    b2 = jax.random.uniform(k_b2, (), minval=-1.0, maxval=1.0)
    gamma = jnp.float32(1.0)
    beta = jnp.float32(0.0)

    # Exercise: the literal spec shape, a small padded shape, and a
    # lane-aligned multi-tile shape (zero-copy path, grid > 1).
    shapes = [(1, 1, 4, 4), (2, 1, 16, 16), (4, 1, 128, 256)]
    for idx, shape in enumerate(shapes):
        kx = jax.random.fold_in(k_x, idx)
        x = jax.random.normal(kx, shape, dtype=jnp.float32)

        out = model_forward(x, w1, b1, gamma, beta, w2, b2)
        out = jax.block_until_ready(out)

        ref = reference_forward(x, w1, b1, gamma, beta, w2, b2)
        assert out.shape == shape
        assert jnp.allclose(out, ref, atol=1e-4, rtol=1e-4), (
            f"mismatch at shape {shape}: max err "
            f"{float(jnp.max(jnp.abs(out - ref)))}"
        )

    print("KERNEL_OK")
</pallas_src>

<mosaic_0001>
module attributes {stable_mosaic.version = 11 : i64} {
  func.func @_stats_kernel(%arg0: i32, %arg1: memref<2xf32, #tpu.memory_space<smem>>, %arg2: memref<8x128xf32, #tpu.memory_space<vmem>>, %arg3: memref<1x128xf32, #tpu.memory_space<vmem>>, %arg4: memref<1x128xf32, #tpu.memory_space<vmem>>) attributes {dimension_semantics = [#tpu.dimension_semantics<arbitrary>], iteration_bounds = array<i64: 1>, scalar_prefetch = 0 : i64, scratch_operands = 0 : i64, tpu.core_type = #tpu.core_type<tc>, window_params = [{transform_indices = @transform_0, window_bounds = array<i64: 2>}, {transform_indices = @transform_1, window_bounds = array<i64: 8, 128>}, {pipeline_mode = #tpu.pipeline_mode<synchronous>, transform_indices = @transform_2, window_bounds = array<i64: 1, 128>}, {pipeline_mode = #tpu.pipeline_mode<synchronous>, transform_indices = @transform_3, window_bounds = array<i64: 1, 128>}]} {
    %c0 = arith.constant 0 : index
    %0 = memref.load %arg1[%c0] : memref<2xf32, #tpu.memory_space<smem>>
    %c1 = arith.constant 1 : index
    %1 = memref.load %arg1[%c1] : memref<2xf32, #tpu.memory_space<smem>>
    %c0_0 = arith.constant 0 : index
    %c0_1 = arith.constant 0 : index
    %2 = vector.load %arg2[%c0_0, %c0_1] : memref<8x128xf32, #tpu.memory_space<vmem>>, vector<8x128xf32>
    %3 = vector.broadcast %0 : f32 to vector<8x128xf32>
    %4 = arith.mulf %2, %3 : vector<8x128xf32>
    %5 = vector.broadcast %1 : f32 to vector<8x128xf32>
    %6 = arith.addf %4, %5 : vector<8x128xf32>
    %cst = arith.constant 0.000000e+00 : f32
    %7 = vector.broadcast %cst : f32 to vector<8x128xf32>
    %8 = arith.maximumf %6, %7 : vector<8x128xf32>
    %c0_i32 = arith.constant 0 : i32
    %9 = arith.cmpi eq, %arg0, %c0_i32 : i32
    %10 = arith.extui %9 : i1 to i32
    %c0_i32_2 = arith.constant 0 : i32
    %11 = arith.cmpi ne, %10, %c0_i32_2 : i32
    scf.if %11 {
      %cst_7 = arith.constant 0.000000e+00 : f32
      %18 = vector.broadcast %cst_7 : f32 to vector<1x128xf32>
      %c0_8 = arith.constant 0 : index
      %c0_9 = arith.constant 0 : index
      %19 = vector.load %arg3[%c0_8, %c0_9] : memref<1x128xf32, #tpu.memory_space<vmem>>, vector<1x128xf32>
      tpu.vector_store %arg3[%c0_8, %c0_9], %18 {strides = array<i32>} : memref<1x128xf32, #tpu.memory_space<vmem>>, vector<1x128xf32>,
      %cst_10 = arith.constant 0.000000e+00 : f32
      %20 = vector.broadcast %cst_10 : f32 to vector<1x128xf32>
      %c0_11 = arith.constant 0 : index
      %c0_12 = arith.constant 0 : index
      %21 = vector.load %arg4[%c0_11, %c0_12] : memref<1x128xf32, #tpu.memory_space<vmem>>, vector<1x128xf32>
      tpu.vector_store %arg4[%c0_11, %c0_12], %20 {strides = array<i32>} : memref<1x128xf32, #tpu.memory_space<vmem>>, vector<1x128xf32>,
    } else {
    }
    %c0_i32_3 = arith.constant 0 : i32
    %12 = arith.cmpi ne, %arg0, %c0_i32_3 : i32
    %13 = arith.extui %12 : i1 to i32
    %c0_i32_4 = arith.constant 0 : i32
    %14 = arith.cmpi ne, %13, %c0_i32_4 : i32
    scf.if %14 {
      %c0_7 = arith.constant 0 : index
      %c0_8 = arith.constant 0 : index
      %18 = vector.load %arg3[%c0_7, %c0_8] : memref<1x128xf32, #tpu.memory_space<vmem>>, vector<1x128xf32>
      %cst_9 = arith.constant dense<0.000000e+00> : vector<128xf32>
      %19 = vector.multi_reduction <add>, %8, %cst_9 [0] : vector<8x128xf32> to vector<128xf32>
      %20 = vector.shape_cast %19 : vector<128xf32> to vector<1x128xf32>
      %21 = arith.addf %18, %20 : vector<1x128xf32>
      %c0_10 = arith.constant 0 : index
      %c0_11 = arith.constant 0 : index
      %22 = vector.load %arg3[%c0_10, %c0_11] : memref<1x128xf32, #tpu.memory_space<vmem>>, vector<1x128xf32>
      tpu.vector_store %arg3[%c0_10, %c0_11], %21 {strides = array<i32>} : memref<1x128xf32, #tpu.memory_space<vmem>>, vector<1x128xf32>,
      %c0_12 = arith.constant 0 : index
      %c0_13 = arith.constant 0 : index
      %23 = vector.load %arg4[%c0_12, %c0_13] : memref<1x128xf32, #tpu.memory_space<vmem>>, vector<1x128xf32>
      %24 = arith.mulf %8, %8 : vector<8x128xf32>
      %cst_14 = arith.constant dense<0.000000e+00> : vector<128xf32>
      %25 = vector.multi_reduction <add>, %24, %cst_14 [0] : vector<8x128xf32> to vector<128xf32>
      %26 = vector.shape_cast %25 : vector<128xf32> to vector<1x128xf32>
      %27 = arith.addf %23, %26 : vector<1x128xf32>
      %c0_15 = arith.constant 0 : index
      %c0_16 = arith.constant 0 : index
      %28 = vector.load %arg4[%c0_15, %c0_16] : memref<1x128xf32, #tpu.memory_space<vmem>>, vector<1x128xf32>
      tpu.vector_store %arg4[%c0_15, %c0_16], %27 {strides = array<i32>} : memref<1x128xf32, #tpu.memory_space<vmem>>, vector<1x128xf32>,
    } else {
    }
    %c0_i32_5 = arith.constant 0 : i32
    %15 = arith.cmpi eq, %arg0, %c0_i32_5 : i32
    %16 = arith.extui %15 : i1 to i32
    %c0_i32_6 = arith.constant 0 : i32
    %17 = arith.cmpi ne, %16, %c0_i32_6 : i32
    scf.if %17 {
      %18 = tpu.iota {dimensions = array<i32: 0>} : vector<8x128xi32>
      %19 = tpu.iota {dimensions = array<i32: 1>} : vector<8x128xi32>
      %c128_i32 = arith.constant 128 : i32
      %20 = vector.broadcast %c128_i32 : i32 to vector<8x128xi32>
      %21 = arith.muli %18, %20 : vector<8x128xi32>
      %22 = arith.addi %21, %19 : vector<8x128xi32>
      %c16_i32 = arith.constant 16 : i32
      %23 = vector.broadcast %c16_i32 : i32 to vector<8x128xi32>
      %24 = arith.cmpi slt, %22, %23 : vector<8x128xi32>
      %cst_7 = arith.constant 0.000000e+00 : f32
      %25 = vector.broadcast %cst_7 : f32 to vector<8x128xf32>
      %26 = arith.select %24, %8, %25 : vector<8x128xi1>, vector<8x128xf32>
      %c0_8 = arith.constant 0 : index
      %c0_9 = arith.constant 0 : index
      %27 = vector.load %arg3[%c0_8, %c0_9] : memref<1x128xf32, #tpu.memory_space<vmem>>, vector<1x128xf32>
      %cst_10 = arith.constant dense<0.000000e+00> : vector<128xf32>
      %28 = vector.multi_reduction <add>, %26, %cst_10 [0] : vector<8x128xf32> to vector<128xf32>
      %29 = vector.shape_cast %28 : vector<128xf32> to vector<1x128xf32>
      %30 = arith.addf %27, %29 : vector<1x128xf32>
      %c0_11 = arith.constant 0 : index
      %c0_12 = arith.constant 0 : index
      %31 = vector.load %arg3[%c0_11, %c0_12] : memref<1x128xf32, #tpu.memory_space<vmem>>, vector<1x128xf32>
      tpu.vector_store %arg3[%c0_11, %c0_12], %30 {strides = array<i32>} : memref<1x128xf32, #tpu.memory_space<vmem>>, vector<1x128xf32>,
      %c0_13 = arith.constant 0 : index
      %c0_14 = arith.constant 0 : index
      %32 = vector.load %arg4[%c0_13, %c0_14] : memref<1x128xf32, #tpu.memory_space<vmem>>, vector<1x128xf32>
      %33 = arith.mulf %26, %26 : vector<8x128xf32>
      %cst_15 = arith.constant dense<0.000000e+00> : vector<128xf32>
      %34 = vector.multi_reduction <add>, %33, %cst_15 [0] : vector<8x128xf32> to vector<128xf32>
      %35 = vector.shape_cast %34 : vector<128xf32> to vector<1x128xf32>
      %36 = arith.addf %32, %35 : vector<1x128xf32>
      %c0_16 = arith.constant 0 : index
      %c0_17 = arith.constant 0 : index
      %37 = vector.load %arg4[%c0_16, %c0_17] : memref<1x128xf32, #tpu.memory_space<vmem>>, vector<1x128xf32>
      tpu.vector_store %arg4[%c0_16, %c0_17], %36 {strides = array<i32>} : memref<1x128xf32, #tpu.memory_space<vmem>>, vector<1x128xf32>,
    } else {
    }
    return
  }
  func.func @transform_0(%arg0: i32) -> i32 {
    %c0_i32 = arith.constant 0 : i32
    %c0_i32_0 = arith.constant 0 : i32
    return %c0_i32 : i32
  }
  func.func @transform_1(%arg0: i32) -> (i32, i32) {
    %c0_i32 = arith.constant 0 : i32
    %c0_i32_0 = arith.constant 0 : i32
    return %arg0, %c0_i32 : i32, i32
  }
  func.func @transform_2(%arg0: i32) -> (i32, i32) {
    %c0_i32 = arith.constant 0 : i32
    %c0_i32_0 = arith.constant 0 : i32
    %c0_i32_1 = arith.constant 0 : i32
    return %c0_i32, %c0_i32_0 : i32, i32
  }
  func.func @transform_3(%arg0: i32) -> (i32, i32) {
    %c0_i32 = arith.constant 0 : i32
    %c0_i32_0 = arith.constant 0 : i32
    %c0_i32_1 = arith.constant 0 : i32
    return %c0_i32, %c0_i32_0 : i32, i32
  }
}

module attributes {stable_mosaic.version = 11 : i64} {
  func.func @_apply_kernel(%arg0: i32, %arg1: memref<4xf32, #tpu.memory_space<smem>>, %arg2: memref<8x128xf32, #tpu.memory_space<vmem>>, %arg3: memref<8x128xf32, #tpu.memory_space<vmem>>) attributes {dimension_semantics = [#tpu.dimension_semantics<parallel>], iteration_bounds = array<i64: 1>, scalar_prefetch = 0 : i64, scratch_operands = 0 : i64, tpu.core_type = #tpu.core_type<tc>, window_params = [{transform_indices = @transform_0, window_bounds = array<i64: 4>}, {transform_indices = @transform_1, window_bounds = array<i64: 8, 128>}, {transform_indices = @transform_2, window_bounds = array<i64: 8, 128>}]} {
    %c0 = arith.constant 0 : index
    %0 = memref.load %arg1[%c0] : memref<4xf32, #tpu.memory_space<smem>>
    %c1 = arith.constant 1 : index
    %1 = memref.load %arg1[%c1] : memref<4xf32, #tpu.memory_space<smem>>
    %c2 = arith.constant 2 : index
    %2 = memref.load %arg1[%c2] : memref<4xf32, #tpu.memory_space<smem>>
    %c3 = arith.constant 3 : index
    %3 = memref.load %arg1[%c3] : memref<4xf32, #tpu.memory_space<smem>>
    %c0_0 = arith.constant 0 : index
    %c0_1 = arith.constant 0 : index
    %4 = vector.load %arg2[%c0_0, %c0_1] : memref<8x128xf32, #tpu.memory_space<vmem>>, vector<8x128xf32>
    %5 = vector.broadcast %0 : f32 to vector<8x128xf32>
    %6 = arith.mulf %4, %5 : vector<8x128xf32>
    %7 = vector.broadcast %1 : f32 to vector<8x128xf32>
    %8 = arith.addf %6, %7 : vector<8x128xf32>
    %cst = arith.constant 0.000000e+00 : f32
    %9 = vector.broadcast %cst : f32 to vector<8x128xf32>
    %10 = arith.maximumf %8, %9 : vector<8x128xf32>
    %11 = vector.broadcast %2 : f32 to vector<8x128xf32>
    %12 = arith.mulf %10, %11 : vector<8x128xf32>
    %13 = vector.broadcast %3 : f32 to vector<8x128xf32>
    %14 = arith.addf %12, %13 : vector<8x128xf32>
    %c0_2 = arith.constant 0 : index
    %c0_3 = arith.constant 0 : index
    %15 = vector.load %arg3[%c0_2, %c0_3] : memref<8x128xf32, #tpu.memory_space<vmem>>, vector<8x128xf32>
    tpu.vector_store %arg3[%c0_2, %c0_3], %14 {strides = array<i32>} : memref<8x128xf32, #tpu.memory_space<vmem>>, vector<8x128xf32>,
    return
  }
  func.func @transform_0(%arg0: i32) -> i32 {
    %c0_i32 = arith.constant 0 : i32
    %c0_i32_0 = arith.constant 0 : i32
    return %c0_i32 : i32
  }
  func.func @transform_1(%arg0: i32) -> (i32, i32) {
    %c0_i32 = arith.constant 0 : i32
    %c0_i32_0 = arith.constant 0 : i32
    return %arg0, %c0_i32 : i32, i32
  }
  func.func @transform_2(%arg0: i32) -> (i32, i32) {
    %c0_i32 = arith.constant 0 : i32
    %c0_i32_0 = arith.constant 0 : i32
    return %arg0, %c0_i32 : i32, i32
  }
}

</mosaic_0001>

<llo_original>
// kernel: model_forward.2
$region0: #{model_forward.2}
  #allocation0 [shape = 'u32[]', space=smem, size = 0x4, offset = 0x4, fixed_abs, tag = 'smem constant byte address 0x4 - core index']
  #allocation1 [shape = 'u32[144,128]{1,0:T(1,128)}', space=vmem, size = 0x12000, scoped, tag = 'internal scratch']
  %s0 = inlined_call_operand.vmem [shape: f32[2], index: 0, kind: input, shape index: {}]
  %s1 = inlined_call_operand.vmem [shape: f32[8,128], index: 1, kind: input, shape index: {}]
  %s2 = inlined_call_operand.vmem [shape: f32[1,128], index: 2, kind: output, shape index: {0}]
  %s3 = inlined_call_operand.vmem [shape: f32[1,128], index: 3, kind: output, shape index: {1}]
  %4 = xla_tuple %s2, %s3
  %s5 = sld [smem:[#allocation0]]
  $region42: #{model_forward.2} parent=0
    _
  %s7 = ssub.s32 1, %s5
  %s8 = scalar_select 0, %s7, %s5
  $region1: #{model_forward.2} parent=0
    #allocation2 [shape = 'u8[512]{0}', space=smem, size = 0x200, scoped, tag = 'input window, operand 0, single buffered']
    #allocation3 [shape = 's32[1]{0}', space=sflag, size = 0x4, scoped, tag = 'scoped memory for model_forward.2']
    %9 = vsyncpa [#allocation3], 0
    // Predicated region
    $region2: #{model_forward.2} parent=1 // pred_check
      _
    $region3: #{model_forward.2} parent=1 // pred_check_branch
      %11 = sbr.rel (0) target = $region5
    $region4: #{model_forward.2} parent=1 // pred_region
      %s13 = ssub.s32 16, 16
      %14 = vsyncadd [#allocation3], %s13
      %s16 = sshll.u32 %s0, 4
      %s17 = int_to_ptr.vmem [resolvable:$true] %s16
      %19 = dma.vmem_to_smem %s17, 16, [#allocation2], [#allocation3]
    $region5: #{model_forward.2} parent=1 // pred_fallthru
      _
    // Predicated region
    $region6: #{model_forward.2} parent=1 // pred_check
      _
    $region7: #{model_forward.2} parent=1 // pred_check_branch
      %21 = sbr.rel (0) target = $region9
    $region8: #{model_forward.2} parent=1 // pred_region
      _
    $region9: #{model_forward.2} parent=1 // pred_fallthru
      _
    // Predicated region
    $region10: #{model_forward.2} parent=1 // pred_check
      _
    $region11: #{model_forward.2} parent=1 // pred_check_branch
      %23 = sbr.rel (0) target = $region13
    $region12: #{model_forward.2} parent=1 // pred_region
      %24 = dma.done [#allocation3], 16
    $region13: #{model_forward.2} parent=1 // pred_fallthru
      _
    %25 = sfence
    %s26 = sld [smem:[#allocation2]]
    %s27 = sld [smem:[#allocation2 + $0x1]]
    %v28 = vld [vmem:[%s1] sm:$0xff]
    %v29 = vstv %s26
    %v30 = vmul.f32 %v28, %v29
    %v31 = vstv %s27
    %v32 = vadd.f32 %v30, %v31
    %v33 = vmax.f32 %v32, 0.0
    %p34 = scmp.eq.s32.totalorder 0, 0
    // Predicated region
    $region14: #{model_forward.2} parent=1 // pred_check
      %p35 = pneg %p34
    $region15: #{model_forward.2} parent=1 // pred_check_branch
      %37 = sbr.rel (%p35) target = $region17
    $region16: #{model_forward.2} parent=1 // pred_region
      %38 = vst [vmem:[%s2] sm:$0x1] 0.0
      %39 = vst [vmem:[%s3] sm:$0x1] 0.0
    $region17: #{model_forward.2} parent=1 // pred_fallthru
      _
    %p40 = scmp.ne.s32.totalorder 0, 0
    // Predicated region
    $region18: #{model_forward.2} parent=1 // pred_check
      %p41 = pneg %p40
    $region19: #{model_forward.2} parent=1 // pred_check_branch
      %43 = sbr.rel (%p41) target = $region21
    $region20: #{model_forward.2} parent=1 // pred_region
      %v44 = vld [vmem:[%s2] sm:$0x1]
      %v45 = vrot.slane %v33, 4
      %v46 = vadd.f32 %v33, %v45
      %v47 = vrot.slane %v46, 2
      %v48 = vadd.f32 %v46, %v47
      %v49 = vrot.slane %v48, 1
      %v50 = vadd.f32 %v48, %v49
      %v51 = vadd.f32 %v44, %v50
      %52 = vst [vmem:[%s2] sm:$0x1] %v51
      %v53 = vld [vmem:[%s3] sm:$0x1]
      %v54 = vmul.f32 %v33, %v33
      %v55 = vrot.slane %v54, 4
      %v56 = vadd.f32 %v54, %v55
      %v57 = vrot.slane %v56, 2
      %v58 = vadd.f32 %v56, %v57
      %v59 = vrot.slane %v58, 1
      %v60 = vadd.f32 %v58, %v59
      %v61 = vadd.f32 %v53, %v60
      %62 = vst [vmem:[%s3] sm:$0x1] %v61
    $region21: #{model_forward.2} parent=1 // pred_fallthru
      _
    // Predicated region
    $region22: #{model_forward.2} parent=1 // pred_check
      %p63 = pneg %p34
    $region23: #{model_forward.2} parent=1 // pred_check_branch
      %65 = sbr.rel (%p63) target = $region25
    $region24: #{model_forward.2} parent=1 // pred_region
      %v66 = vlaneseq
      %v67 = vshrl.u32 %v66, 7
      %v68 = vlaneseq
      %v69 = vand.u32 %v68, 127
      %v70 = vmul.u32 %v67, 128
      %v71 = vadd.s32 %v70, %v69
      %vm72 = vcmp.lt.s32.totalorder %v71, 16
      %v73 = vsel %vm72, %v33, 0.0
      %v74 = vld [vmem:[%s2] sm:$0x1]
      %v75 = vrot.slane %v73, 4
      %v76 = vadd.f32 %v73, %v75
      %v77 = vrot.slane %v76, 2
      %v78 = vadd.f32 %v76, %v77
      %v79 = vrot.slane %v78, 1
      %v80 = vadd.f32 %v78, %v79
      %v81 = vadd.f32 %v74, %v80
      %82 = vst [vmem:[%s2] sm:$0x1] %v81
      %v83 = vld [vmem:[%s3] sm:$0x1]
      %v84 = vmul.f32 %v73, %v73
      %v85 = vrot.slane %v84, 4
      %v86 = vadd.f32 %v84, %v85
      %v87 = vrot.slane %v86, 2
      %v88 = vadd.f32 %v86, %v87
      %v89 = vrot.slane %v88, 1
      %v90 = vadd.f32 %v88, %v89
      %v91 = vadd.f32 %v83, %v90
      %92 = vst [vmem:[%s3] sm:$0x1] %v91
    $region25: #{model_forward.2} parent=1 // pred_fallthru
      _
    // Predicated region
    $region26: #{model_forward.2} parent=1 // pred_check
      _
    $region27: #{model_forward.2} parent=1 // pred_check_branch
      %94 = sbr.rel (0) target = $region29
    $region28: #{model_forward.2} parent=1 // pred_region
      _
    $region29: #{model_forward.2} parent=1 // pred_fallthru
      _
    // Predicated region
    $region30: #{model_forward.2} parent=1 // pred_check
      _
    $region31: #{model_forward.2} parent=1 // pred_check_branch
      %96 = sbr.rel (0) target = $region33
    $region32: #{model_forward.2} parent=1 // pred_region
      _
    $region33: #{model_forward.2} parent=1 // pred_fallthru
      _
    // Predicated region
    $region34: #{model_forward.2} parent=1 // pred_check
      _
    $region35: #{model_forward.2} parent=1 // pred_check_branch
      %98 = sbr.rel (0) target = $region37
    $region36: #{model_forward.2} parent=1 // pred_region
      _
    $region37: #{model_forward.2} parent=1 // pred_fallthru
      _
    // Predicated region
    $region38: #{model_forward.2} parent=1 // pred_check
      _
    $region39: #{model_forward.2} parent=1 // pred_check_branch
      %100 = sbr.rel (0) target = $region41
    $region40: #{model_forward.2} parent=1 // pred_region
      _
    $region41: #{model_forward.2} parent=1 // pred_fallthru
      _
    %101 = vsyncpa [#allocation3], 1

// kernel: model_forward.3
$region0: #{model_forward.3}
  #allocation0 [shape = 'u32[]', space=smem, size = 0x4, offset = 0x4, fixed_abs, tag = 'smem constant byte address 0x4 - core index']
  #allocation1 [shape = 'u32[144,128]{1,0:T(1,128)}', space=vmem, size = 0x12000, scoped, tag = 'internal scratch']
  %s0 = inlined_call_operand.vmem [shape: f32[4], index: 0, kind: input, shape index: {}]
  %s1 = inlined_call_operand.vmem [shape: f32[8,128], index: 1, kind: input, shape index: {}]
  %s2 = inlined_call_operand.vmem [shape: f32[8,128], index: 2, kind: output, shape index: {}]
  %s3 = sld [smem:[#allocation0]]
  $region22: #{model_forward.3} parent=0
    _
  %s5 = ssub.s32 1, %s3
  %s6 = scalar_select 0, %s5, %s3
  $region1: #{model_forward.3} parent=0
    #allocation2 [shape = 'u8[512]{0}', space=smem, size = 0x200, scoped, tag = 'input window, operand 0, single buffered']
    #allocation3 [shape = 's32[1]{0}', space=sflag, size = 0x4, scoped, tag = 'scoped memory for model_forward.3']
    %7 = vsyncpa [#allocation3], 0
    // Predicated region
    $region2: #{model_forward.3} parent=1 // pred_check
      _
    $region3: #{model_forward.3} parent=1 // pred_check_branch
      %9 = sbr.rel (0) target = $region5
    $region4: #{model_forward.3} parent=1 // pred_region
      %s11 = ssub.s32 16, 16
      %12 = vsyncadd [#allocation3], %s11
      %s14 = sshll.u32 %s0, 4
      %s15 = int_to_ptr.vmem [resolvable:$true] %s14
      %17 = dma.vmem_to_smem %s15, 16, [#allocation2], [#allocation3]
    $region5: #{model_forward.3} parent=1 // pred_fallthru
      _
    // Predicated region
    $region6: #{model_forward.3} parent=1 // pred_check
      _
    $region7: #{model_forward.3} parent=1 // pred_check_branch
      %19 = sbr.rel (0) target = $region9
    $region8: #{model_forward.3} parent=1 // pred_region
      _
    $region9: #{model_forward.3} parent=1 // pred_fallthru
      _
    // Predicated region
    $region10: #{model_forward.3} parent=1 // pred_check
      _
    $region11: #{model_forward.3} parent=1 // pred_check_branch
      %21 = sbr.rel (0) target = $region13
    $region12: #{model_forward.3} parent=1 // pred_region
      %22 = dma.done [#allocation3], 16
    $region13: #{model_forward.3} parent=1 // pred_fallthru
      _
    %23 = sfence
    %s24 = sld [smem:[#allocation2]]
    %s25 = sld [smem:[#allocation2 + $0x1]]
    %s26 = sld [smem:[#allocation2 + $0x2]]
    %s27 = sld [smem:[#allocation2 + $0x3]]
    %v28 = vld [vmem:[%s1] sm:$0xff]
    %v29 = vstv %s24
    %v30 = vmul.f32 %v28, %v29
    %v31 = vstv %s25
    %v32 = vadd.f32 %v30, %v31
    %v33 = vmax.f32 %v32, 0.0
    %v34 = vstv %s26
    %v35 = vmul.f32 %v33, %v34
    %v36 = vstv %s27
    %v37 = vadd.f32 %v35, %v36
    %38 = vst [vmem:[%s2] sm:$0xff] %v37
    // Predicated region
    $region14: #{model_forward.3} parent=1 // pred_check
      _
    $region15: #{model_forward.3} parent=1 // pred_check_branch
      %40 = sbr.rel (0) target = $region17
    $region16: #{model_forward.3} parent=1 // pred_region
      _
    $region17: #{model_forward.3} parent=1 // pred_fallthru
      _
    // Predicated region
    $region18: #{model_forward.3} parent=1 // pred_check
      _
    $region19: #{model_forward.3} parent=1 // pred_check_branch
      %42 = sbr.rel (0) target = $region21
    $region20: #{model_forward.3} parent=1 // pred_region
      _
    $region21: #{model_forward.3} parent=1 // pred_fallthru
      _
    %43 = vsyncpa [#allocation3], 1

</llo_original>
